<compile_context>
chip_gen: v6e
topology: v6e:2x2x1
jax: 0.10.0
libtpu: 0.0.40
codegen_flags: <defaults>
</compile_context>

<pallas_src>
import functools

import jax
import jax.numpy as jnp
from jax.experimental import pallas as pl
from jax.experimental.pallas import tpu as pltpu

FRAME = 128      # synthetic wav2vec feature-encoder frame (kernel == stride == FRAME)
HIDDEN = 128     # synthetic hidden width
VOCAB = 128      # synthetic CTC vocab; token id 0 is treated as the CTC blank
EPS = 1e-7
SUBLANES = 8     # f32 sublane packing factor


def _round_up(x, m):
    return ((x + m - 1) // m) * m


# ---------------------------------------------------------------------------
# Kernel 1: per-clip sum / sum-of-squares (feeds mean & inv-std).
# Audio of each clip is viewed as 8 sublane rows so every f32 vreg is fully used.
# ---------------------------------------------------------------------------
def _moments_kernel(x_ref, sum_ref, sq_ref, *, n_cols, tile_cols):
    t = pl.program_id(0)

    @pl.when(t == 0)
    def _():
        sum_ref[...] = jnp.zeros_like(sum_ref)
        sq_ref[...] = jnp.zeros_like(sq_ref)

    x = x_ref[...].astype(jnp.float32)
    col = t * tile_cols + jax.lax.broadcasted_iota(jnp.int32, x.shape, 1)
    x = jnp.where(col < n_cols, x, 0.0)                 # mask ragged / OOB columns
    sum_ref[...] += jnp.sum(x, axis=1, keepdims=True)
    sq_ref[...] += jnp.sum(x * x, axis=1, keepdims=True)


def clip_moments(audio):
    """audio: (B, L) f32 with L % 8 == 0. Returns (B*8, 1) partial sum and sumsq."""
    B, L = audio.shape
    B8 = B * SUBLANES
    L8 = L // SUBLANES
    x = audio.reshape(B8, L8)                            # sublane-dense, per-clip rows
    tile_cols = min(8192, _round_up(L8, 128))
    grid = (pl.cdiv(L8, tile_cols),)
    kernel = functools.partial(_moments_kernel, n_cols=L8, tile_cols=tile_cols)
    return pl.pallas_call(
        kernel,
        out_shape=(jax.ShapeDtypeStruct((B8, 1), jnp.float32),
                   jax.ShapeDtypeStruct((B8, 1), jnp.float32)),
        grid=grid,
        in_specs=[pl.BlockSpec((B8, tile_cols), lambda i: (0, i))],
        out_specs=(pl.BlockSpec((B8, 1), lambda i: (0, 0)),
                   pl.BlockSpec((B8, 1), lambda i: (0, 0))),
        compiler_params=pltpu.CompilerParams(dimension_semantics=("arbitrary",)),
    )(x)


# ---------------------------------------------------------------------------
# Kernel 2: fused  normalize ∘ (frames @ Wenc + benc) ∘ GELU ∘ (@ Whead + bhead) ∘ argmax
# Normalization is folded in:  h = istd*(f@W) + (b_enc - mean*istd*colsum(W))
# scale_rows = istd per frame row, off_rows = -mean*istd per frame row.
# ---------------------------------------------------------------------------
def _ctc_head_kernel(f_ref, scale_ref, off_ref, wenc_ref, csum_ref, benc_ref,
                     whead_ref, bhead_ref, o_ref, *, tile_rows):
    f = f_ref[...].astype(jnp.bfloat16)                                    # (TF, FRAME)
    acc = jnp.dot(f, wenc_ref[...], preferred_element_type=jnp.float32)    # (TF, H) f32
    h = scale_ref[...] * acc + off_ref[...] * csum_ref[...] + benc_ref[...]
    h = jax.nn.gelu(h)
    logits = jnp.dot(h.astype(jnp.bfloat16), whead_ref[...],
                     preferred_element_type=jnp.float32) + bhead_ref[...]  # (TF, V)
    # fused argmax over vocab (first max index); lane-dense int32 output
    lg = logits.reshape(tile_rows // 128, 128, VOCAB)
    mx = jnp.max(lg, axis=-1, keepdims=True)
    lane = jax.lax.broadcasted_iota(jnp.int32, lg.shape, 2)
    o_ref[...] = jnp.min(jnp.where(lg == mx, lane, VOCAB), axis=-1)


def ctc_token_ids(frames, scale_rows, off_rows, w_enc, w_colsum, b_enc, w_head, b_head):
    R, K = frames.shape
    V = w_head.shape[1]
    tile_rows = min(1024, _round_up(R, 128))             # >=512 for real clips, VMEM-safe on v5e
    out_rows = pl.cdiv(R, 128)
    grid = (pl.cdiv(R, tile_rows),)
    kernel = functools.partial(_ctc_head_kernel, tile_rows=tile_rows)
    ids = pl.pallas_call(
        kernel,
        out_shape=jax.ShapeDtypeStruct((out_rows, 128), jnp.int32),
        grid=grid,
        in_specs=[
            pl.BlockSpec((tile_rows, K), lambda i: (i, 0)),   # frame tile
            pl.BlockSpec((tile_rows, 1), lambda i: (i, 0)),   # per-row istd
            pl.BlockSpec((tile_rows, 1), lambda i: (i, 0)),   # per-row -mean*istd
            pl.BlockSpec((K, HIDDEN), lambda i: (0, 0)),      # Wenc (bf16, resident)
            pl.BlockSpec((1, HIDDEN), lambda i: (0, 0)),      # colsum(Wenc)
            pl.BlockSpec((1, HIDDEN), lambda i: (0, 0)),      # benc
            pl.BlockSpec((HIDDEN, V), lambda i: (0, 0)),      # Whead (bf16, resident)
            pl.BlockSpec((1, V), lambda i: (0, 0)),           # bhead
        ],
        out_specs=pl.BlockSpec((tile_rows // 128, 128), lambda i: (i, 0)),
        compiler_params=pltpu.CompilerParams(dimension_semantics=("parallel",)),
    )(frames, scale_rows, off_rows, w_enc, w_colsum, b_enc, w_head, b_head)
    return ids.reshape(-1)[:R]


# ---------------------------------------------------------------------------
# Single jitted device program: both Pallas kernels + tiny XLA glue.
# Returns the first / last non-blank frame of clip 0 (int32 scalars).
# ---------------------------------------------------------------------------
@jax.jit
def _nonblank_span(audio, w_enc, w_colsum, b_enc, w_head, b_head):
    B, T = audio.shape
    n_frames = T // FRAME
    L = n_frames * FRAME
    clip = audio[:, :L].astype(jnp.float32)

    # --- kernel 1: per-clip moments (the PyTorch reference normalizes each clip) ---
    row_sum, row_sq = clip_moments(clip)
    sums = row_sum.reshape(B, SUBLANES).sum(axis=1)
    sqs = row_sq.reshape(B, SUBLANES).sum(axis=1)
    mean = sums / L
    var = (sqs - sums * mean) / max(L - 1, 1)             # unbiased, matches torch.var default
    istd = jax.lax.rsqrt(var + EPS)

    # --- kernel 2: fused normalize+conv-as-matmul+GELU+head+argmax ---
    frames = clip.reshape(B * n_frames, FRAME)
    scale_rows = jnp.repeat(istd, n_frames)[:, None]
    off_rows = jnp.repeat(-mean * istd, n_frames)[:, None]
    ids = ctc_token_ids(frames, scale_rows, off_rows, w_enc, w_colsum,
                        b_enc, w_head, b_head).reshape(B, n_frames)

    # non-blank span of clip 0 (token 0 == CTC blank)
    nb = ids[0] != 0
    any_nb = jnp.any(nb)
    first = jnp.where(any_nb, jnp.argmax(nb), 0)
    last = jnp.where(any_nb, n_frames - 1 - jnp.argmax(nb[::-1]), n_frames - 1)
    return first.astype(jnp.int32), last.astype(jnp.int32)


# ---------------------------------------------------------------------------
# Wav2VecAlignment (JAX port, synthetic deterministic weights)
# ---------------------------------------------------------------------------
class Wav2VecAlignment:
    def __init__(self):
        k1, k2, k3, k4 = jax.random.split(jax.random.PRNGKey(42), 4)
        w_enc = 0.02 * jax.random.normal(k1, (FRAME, HIDDEN), jnp.float32)
        w_head = 0.02 * jax.random.normal(k3, (HIDDEN, VOCAB), jnp.float32)
        self.w_colsum = jnp.sum(w_enc, axis=0, keepdims=True)        # (1, H) f32
        self.w_enc = w_enc.astype(jnp.bfloat16)                      # bf16 MXU operands
        self.w_head = w_head.astype(jnp.bfloat16)
        self.b_enc = 0.02 * jax.random.normal(k2, (1, HIDDEN), jnp.float32)
        self.b_head = 0.02 * jax.random.normal(k4, (1, VOCAB), jnp.float32)

    def align(self, audio, expected_text):
        # TODO(synk): torchaudio 24kHz->16kHz resample not translated (interp glue).
        B, T = audio.shape
        n = max(len(expected_text), 1)
        if T < FRAME:
            return [int(i * T / n) for i in range(n)]
        first_f, last_f = _nonblank_span(audio, self.w_enc, self.w_colsum,
                                         self.b_enc, self.w_head, self.b_head)
        first_i, last_i = (int(v) for v in jax.device_get((first_f, last_f)))
        # TODO(synk): Wav2Vec2CTCTokenizer decode + exact CTC character alignment not
        # translated; characters are spread uniformly over the predicted non-blank span.
        start = first_i * FRAME
        span = max((last_i + 1) * FRAME - start, 1)
        return [start + int(i * span / n) for i in range(n)]

    def redact(self, audio, expected_text):
        if '[' not in expected_text:
            return audio
        splitted = expected_text.split('[')
        fully_split = [splitted[0]]
        for spl in splitted[1:]:
            assert ']' in spl, 'Every "[" character must be paired with a "]" with no nesting.'
            fully_split.extend(spl.split(']'))
        non_redacted_intervals = []
        last_point = 0
        for i in range(len(fully_split)):
            if i % 2 == 0 and fully_split[i] != "":
                end_interval = max(0, last_point + len(fully_split[i]) - 1)
                non_redacted_intervals.append((last_point, end_interval))
            last_point += len(fully_split[i])
        bare_text = ''.join(fully_split)
        alignments = self.align(audio, bare_text)
        output_audio = []
        for start, stop in non_redacted_intervals:
            output_audio.append(audio[:, alignments[start]:alignments[stop]])
        return jnp.concatenate(output_audio, axis=-1)


class Postprocess:
    def __init__(self):
        self.aligner = Wav2VecAlignment()

    def __call__(self, clip, text):
        # clip: [B, 1, T]  ->  redact([B, T], text)  ->  [B, 1, T']
        out = self.aligner.redact(jnp.squeeze(clip, axis=1), text)
        return out[:, None, :]


if __name__ == "__main__":
    B, T = 2, 32 * FRAME                      # small: 2 clips, 4096 samples
    clip = jax.random.normal(jax.random.PRNGKey(0), (B, 1, T), jnp.float32)
    text = "hello [redacted secret] world"
    model = Postprocess()
    out = model(clip, text)
    jax.block_until_ready(out)
    assert out.ndim == 3 and out.shape[0] == B and out.shape[1] == 1
    print("KERNEL_OK")
</pallas_src>

<mosaic_0001>
module attributes {stable_mosaic.version = 11 : i64} {
  func.func @_moments_kernel(%arg0: i32, %arg1: memref<16x512xf32, #tpu.memory_space<vmem>>, %arg2: memref<16x1xf32, #tpu.memory_space<vmem>>, %arg3: memref<16x1xf32, #tpu.memory_space<vmem>>) attributes {dimension_semantics = [#tpu.dimension_semantics<arbitrary>], iteration_bounds = array<i64: 1>, scalar_prefetch = 0 : i64, scratch_operands = 0 : i64, tpu.core_type = #tpu.core_type<tc>, window_params = [{transform_indices = @transform_0, window_bounds = array<i64: 16, 512>}, {pipeline_mode = #tpu.pipeline_mode<synchronous>, transform_indices = @transform_1, window_bounds = array<i64: 16, 1>}, {pipeline_mode = #tpu.pipeline_mode<synchronous>, transform_indices = @transform_2, window_bounds = array<i64: 16, 1>}]} {
    %c0_i32 = arith.constant 0 : i32
    %0 = arith.cmpi eq, %arg0, %c0_i32 : i32
    %1 = arith.extui %0 : i1 to i32
    %c0_i32_0 = arith.constant 0 : i32
    %2 = arith.cmpi ne, %1, %c0_i32_0 : i32
    scf.if %2 {
      %cst_13 = arith.constant 0.000000e+00 : f32
      %23 = vector.broadcast %cst_13 : f32 to vector<16x1xf32>
      %c0_14 = arith.constant 0 : index
      %c0_15 = arith.constant 0 : index
      %24 = vector.load %arg2[%c0_14, %c0_15] : memref<16x1xf32, #tpu.memory_space<vmem>>, vector<16x1xf32>
      tpu.vector_store %arg2[%c0_14, %c0_15], %23 {strides = array<i32>} : memref<16x1xf32, #tpu.memory_space<vmem>>, vector<16x1xf32>,
      %cst_16 = arith.constant 0.000000e+00 : f32
      %25 = vector.broadcast %cst_16 : f32 to vector<16x1xf32>
      %c0_17 = arith.constant 0 : index
      %c0_18 = arith.constant 0 : index
      %26 = vector.load %arg3[%c0_17, %c0_18] : memref<16x1xf32, #tpu.memory_space<vmem>>, vector<16x1xf32>
      tpu.vector_store %arg3[%c0_17, %c0_18], %25 {strides = array<i32>} : memref<16x1xf32, #tpu.memory_space<vmem>>, vector<16x1xf32>,
    } else {
    }
    %c0 = arith.constant 0 : index
    %c0_1 = arith.constant 0 : index
    %3 = vector.load %arg1[%c0, %c0_1] : memref<16x512xf32, #tpu.memory_space<vmem>>, vector<16x512xf32>
    %c512_i32 = arith.constant 512 : i32
    %4 = arith.muli %arg0, %c512_i32 : i32
    %5 = tpu.iota {dimensions = array<i32: 1>} : vector<16x512xi32>
    %6 = vector.broadcast %4 : i32 to vector<16x512xi32>
    %7 = arith.addi %6, %5 : vector<16x512xi32>
    %c512_i32_2 = arith.constant 512 : i32
    %8 = vector.broadcast %c512_i32_2 : i32 to vector<16x512xi32>
    %9 = arith.cmpi slt, %7, %8 : vector<16x512xi32>
    %cst = arith.constant 0.000000e+00 : f32
    %10 = vector.broadcast %cst : f32 to vector<16x512xf32>
    %11 = arith.select %9, %3, %10 : vector<16x512xi1>, vector<16x512xf32>
    %c0_3 = arith.constant 0 : index
    %c0_4 = arith.constant 0 : index
    %12 = vector.load %arg2[%c0_3, %c0_4] : memref<16x1xf32, #tpu.memory_space<vmem>>, vector<16x1xf32>
    %cst_5 = arith.constant dense<0.000000e+00> : vector<16xf32>
    %13 = vector.multi_reduction <add>, %11, %cst_5 [1] : vector<16x512xf32> to vector<16xf32>
    %14 = vector.shape_cast %13 : vector<16xf32> to vector<16x1xf32>
    %15 = arith.addf %12, %14 : vector<16x1xf32>
    %c0_6 = arith.constant 0 : index
    %c0_7 = arith.constant 0 : index
    %16 = vector.load %arg2[%c0_6, %c0_7] : memref<16x1xf32, #tpu.memory_space<vmem>>, vector<16x1xf32>
    tpu.vector_store %arg2[%c0_6, %c0_7], %15 {strides = array<i32>} : memref<16x1xf32, #tpu.memory_space<vmem>>, vector<16x1xf32>,
    %c0_8 = arith.constant 0 : index
    %c0_9 = arith.constant 0 : index
    %17 = vector.load %arg3[%c0_8, %c0_9] : memref<16x1xf32, #tpu.memory_space<vmem>>, vector<16x1xf32>
    %18 = arith.mulf %11, %11 : vector<16x512xf32>
    %cst_10 = arith.constant dense<0.000000e+00> : vector<16xf32>
    %19 = vector.multi_reduction <add>, %18, %cst_10 [1] : vector<16x512xf32> to vector<16xf32>
    %20 = vector.shape_cast %19 : vector<16xf32> to vector<16x1xf32>
    %21 = arith.addf %17, %20 : vector<16x1xf32>
    %c0_11 = arith.constant 0 : index
    %c0_12 = arith.constant 0 : index
    %22 = vector.load %arg3[%c0_11, %c0_12] : memref<16x1xf32, #tpu.memory_space<vmem>>, vector<16x1xf32>
    tpu.vector_store %arg3[%c0_11, %c0_12], %21 {strides = array<i32>} : memref<16x1xf32, #tpu.memory_space<vmem>>, vector<16x1xf32>,
    return
  }
  func.func @transform_0(%arg0: i32) -> (i32, i32) {
    %c0_i32 = arith.constant 0 : i32
    %c0_i32_0 = arith.constant 0 : i32
    return %c0_i32, %arg0 : i32, i32
  }
  func.func @transform_1(%arg0: i32) -> (i32, i32) {
    %c0_i32 = arith.constant 0 : i32
    %c0_i32_0 = arith.constant 0 : i32
    %c0_i32_1 = arith.constant 0 : i32
    return %c0_i32, %c0_i32_0 : i32, i32
  }
  func.func @transform_2(%arg0: i32) -> (i32, i32) {
    %c0_i32 = arith.constant 0 : i32
    %c0_i32_0 = arith.constant 0 : i32
    %c0_i32_1 = arith.constant 0 : i32
    return %c0_i32, %c0_i32_0 : i32, i32
  }
}

module attributes {stable_mosaic.version = 11 : i64} {
  func.func @_ctc_head_kernel(%arg0: i32, %arg1: memref<128x128xf32, #tpu.memory_space<vmem>>, %arg2: memref<128x1xf32, #tpu.memory_space<vmem>>, %arg3: memref<128x1xf32, #tpu.memory_space<vmem>>, %arg4: memref<128x128xbf16, #tpu.memory_space<vmem>>, %arg5: memref<1x128xf32, #tpu.memory_space<vmem>>, %arg6: memref<1x128xf32, #tpu.memory_space<vmem>>, %arg7: memref<128x128xbf16, #tpu.memory_space<vmem>>, %arg8: memref<1x128xf32, #tpu.memory_space<vmem>>, %arg9: memref<1x128xi32, #tpu.memory_space<vmem>>) attributes {dimension_semantics = [#tpu.dimension_semantics<parallel>], iteration_bounds = array<i64: 1>, scalar_prefetch = 0 : i64, scratch_operands = 0 : i64, tpu.core_type = #tpu.core_type<tc>, window_params = [{transform_indices = @transform_0, window_bounds = array<i64: 128, 128>}, {transform_indices = @transform_1, window_bounds = array<i64: 128, 1>}, {transform_indices = @transform_2, window_bounds = array<i64: 128, 1>}, {pipeline_mode = #tpu.pipeline_mode<synchronous>, transform_indices = @transform_3, window_bounds = array<i64: 128, 128>}, {pipeline_mode = #tpu.pipeline_mode<synchronous>, transform_indices = @transform_4, window_bounds = array<i64: 1, 128>}, {pipeline_mode = #tpu.pipeline_mode<synchronous>, transform_indices = @transform_5, window_bounds = array<i64: 1, 128>}, {pipeline_mode = #tpu.pipeline_mode<synchronous>, transform_indices = @transform_6, window_bounds = array<i64: 128, 128>}, {pipeline_mode = #tpu.pipeline_mode<synchronous>, transform_indices = @transform_7, window_bounds = array<i64: 1, 128>}, {transform_indices = @transform_8, window_bounds = array<i64: 1, 128>}]} {
    %c0 = arith.constant 0 : index
    %c0_0 = arith.constant 0 : index
    %0 = vector.load %arg1[%c0, %c0_0] : memref<128x128xf32, #tpu.memory_space<vmem>>, vector<128x128xf32>
    %1 = arith.truncf %0 : vector<128x128xf32> to vector<128x128xbf16>
    %c0_1 = arith.constant 0 : index
    %c0_2 = arith.constant 0 : index
    %2 = vector.load %arg4[%c0_1, %c0_2] : memref<128x128xbf16, #tpu.memory_space<vmem>>, vector<128x128xbf16>
    %cst = arith.constant dense<0.000000e+00> : vector<128x128xf32>
    %3 = tpu.matmul %1, %2, %cst {dimension_numbers = #tpu.dot_dimension_numbers<[1], [0], [0], [1], [0, 0, 1, 1], [], []>} : vector<128x128xbf16>, vector<128x128xbf16>, vector<128x128xf32> -> vector<128x128xf32>
    %c0_3 = arith.constant 0 : index
    %c0_4 = arith.constant 0 : index
    %4 = vector.load %arg2[%c0_3, %c0_4] : memref<128x1xf32, #tpu.memory_space<vmem>>, vector<128x1xf32>
    %5 = vector.broadcast %4 : vector<128x1xf32> to vector<128x128xf32>
    %6 = arith.mulf %5, %3 : vector<128x128xf32>
    %c0_5 = arith.constant 0 : index
    %c0_6 = arith.constant 0 : index
    %7 = vector.load %arg3[%c0_5, %c0_6] : memref<128x1xf32, #tpu.memory_space<vmem>>, vector<128x1xf32>
    %c0_7 = arith.constant 0 : index
    %c0_8 = arith.constant 0 : index
    %8 = vector.load %arg5[%c0_7, %c0_8] : memref<1x128xf32, #tpu.memory_space<vmem>>, vector<1x128xf32>
    %9 = vector.broadcast %7 : vector<128x1xf32> to vector<128x128xf32>
    %10 = vector.broadcast %8 : vector<1x128xf32> to vector<128x128xf32>
    %11 = arith.mulf %9, %10 : vector<128x128xf32>
    %12 = arith.addf %6, %11 : vector<128x128xf32>
    %c0_9 = arith.constant 0 : index
    %c0_10 = arith.constant 0 : index
    %13 = vector.load %arg6[%c0_9, %c0_10] : memref<1x128xf32, #tpu.memory_space<vmem>>, vector<1x128xf32>
    %14 = vector.broadcast %13 : vector<1x128xf32> to vector<128x128xf32>
    %15 = arith.addf %12, %14 : vector<128x128xf32>
    %16 = arith.mulf %15, %15 : vector<128x128xf32>
    %17 = arith.mulf %15, %16 : vector<128x128xf32>
    %cst_11 = arith.constant 4.471500e-02 : f32
    %18 = vector.broadcast %cst_11 : f32 to vector<128x128xf32>
    %19 = arith.mulf %18, %17 : vector<128x128xf32>
    %20 = arith.addf %15, %19 : vector<128x128xf32>
    %cst_12 = arith.constant 0.797884583 : f32
    %21 = vector.broadcast %cst_12 : f32 to vector<128x128xf32>
    %22 = arith.mulf %21, %20 : vector<128x128xf32>
    %23 = math.tanh %22 : vector<128x128xf32>
    %cst_13 = arith.constant 1.000000e+00 : f32
    %24 = vector.broadcast %cst_13 : f32 to vector<128x128xf32>
    %25 = arith.addf %24, %23 : vector<128x128xf32>
    %cst_14 = arith.constant 5.000000e-01 : f32
    %26 = vector.broadcast %cst_14 : f32 to vector<128x128xf32>
    %27 = arith.mulf %26, %25 : vector<128x128xf32>
    %28 = arith.mulf %15, %27 : vector<128x128xf32>
    %29 = arith.truncf %28 : vector<128x128xf32> to vector<128x128xbf16>
    %c0_15 = arith.constant 0 : index
    %c0_16 = arith.constant 0 : index
    %30 = vector.load %arg7[%c0_15, %c0_16] : memref<128x128xbf16, #tpu.memory_space<vmem>>, vector<128x128xbf16>
    %cst_17 = arith.constant dense<0.000000e+00> : vector<128x128xf32>
    %31 = tpu.matmul %29, %30, %cst_17 {dimension_numbers = #tpu.dot_dimension_numbers<[1], [0], [0], [1], [0, 0, 1, 1], [], []>} : vector<128x128xbf16>, vector<128x128xbf16>, vector<128x128xf32> -> vector<128x128xf32>
    %c0_18 = arith.constant 0 : index
    %c0_19 = arith.constant 0 : index
    %32 = vector.load %arg8[%c0_18, %c0_19] : memref<1x128xf32, #tpu.memory_space<vmem>>, vector<1x128xf32>
    %33 = vector.broadcast %32 : vector<1x128xf32> to vector<128x128xf32>
    %34 = arith.addf %31, %33 : vector<128x128xf32>
    %35 = vector.shape_cast %34 : vector<128x128xf32> to vector<1x128x128xf32>
    %cst_20 = arith.constant dense<0xFF800000> : vector<1x128xf32>
    %36 = vector.multi_reduction <maximumf>, %35, %cst_20 [2] : vector<1x128x128xf32> to vector<1x128xf32>
    %37 = vector.shape_cast %36 : vector<1x128xf32> to vector<1x128x1xf32>
    %38 = tpu.iota {dimensions = array<i32: 2>} : vector<1x128x128xi32>
    %39 = vector.broadcast %37 : vector<1x128x1xf32> to vector<1x128x128xf32>
    %40 = arith.cmpf oeq, %35, %39 : vector<1x128x128xf32>
    %c128_i32 = arith.constant 128 : i32
    %41 = vector.broadcast %c128_i32 : i32 to vector<1x128x128xi32>
    %42 = arith.select %40, %38, %41 : vector<1x128x128xi1>, vector<1x128x128xi32>
    %cst_21 = arith.constant dense<2147483647> : vector<1x128xi32>
    %43 = vector.multi_reduction <minsi>, %42, %cst_21 [2] : vector<1x128x128xi32> to vector<1x128xi32>
    %c0_22 = arith.constant 0 : index
    %c0_23 = arith.constant 0 : index
    %44 = vector.load %arg9[%c0_22, %c0_23] : memref<1x128xi32, #tpu.memory_space<vmem>>, vector<1x128xi32>
    tpu.vector_store %arg9[%c0_22, %c0_23], %43 {strides = array<i32>} : memref<1x128xi32, #tpu.memory_space<vmem>>, vector<1x128xi32>,
    return
  }
  func.func @transform_0(%arg0: i32) -> (i32, i32) {
    %c0_i32 = arith.constant 0 : i32
    %c0_i32_0 = arith.constant 0 : i32
    return %arg0, %c0_i32 : i32, i32
  }
  func.func @transform_1(%arg0: i32) -> (i32, i32) {
    %c0_i32 = arith.constant 0 : i32
    %c0_i32_0 = arith.constant 0 : i32
    return %arg0, %c0_i32 : i32, i32
  }
  func.func @transform_2(%arg0: i32) -> (i32, i32) {
    %c0_i32 = arith.constant 0 : i32
    %c0_i32_0 = arith.constant 0 : i32
    return %arg0, %c0_i32 : i32, i32
  }
  func.func @transform_3(%arg0: i32) -> (i32, i32) {
    %c0_i32 = arith.constant 0 : i32
    %c0_i32_0 = arith.constant 0 : i32
    %c0_i32_1 = arith.constant 0 : i32
    return %c0_i32, %c0_i32_0 : i32, i32
  }
  func.func @transform_4(%arg0: i32) -> (i32, i32) {
    %c0_i32 = arith.constant 0 : i32
    %c0_i32_0 = arith.constant 0 : i32
    %c0_i32_1 = arith.constant 0 : i32
    return %c0_i32, %c0_i32_0 : i32, i32
  }
  func.func @transform_5(%arg0: i32) -> (i32, i32) {
    %c0_i32 = arith.constant 0 : i32
    %c0_i32_0 = arith.constant 0 : i32
    %c0_i32_1 = arith.constant 0 : i32
    return %c0_i32, %c0_i32_0 : i32, i32
  }
  func.func @transform_6(%arg0: i32) -> (i32, i32) {
    %c0_i32 = arith.constant 0 : i32
    %c0_i32_0 = arith.constant 0 : i32
    %c0_i32_1 = arith.constant 0 : i32
    return %c0_i32, %c0_i32_0 : i32, i32
  }
  func.func @transform_7(%arg0: i32) -> (i32, i32) {
    %c0_i32 = arith.constant 0 : i32
    %c0_i32_0 = arith.constant 0 : i32
    %c0_i32_1 = arith.constant 0 : i32
    return %c0_i32, %c0_i32_0 : i32, i32
  }
  func.func @transform_8(%arg0: i32) -> (i32, i32) {
    %c0_i32 = arith.constant 0 : i32
    %c0_i32_0 = arith.constant 0 : i32
    return %arg0, %c0_i32 : i32, i32
  }
}

</mosaic_0001>

<llo_original>
// kernel: _nonblank_span.2
$region0: #{_nonblank_span.2}
  #allocation0 [shape = 'u32[]', space=smem, size = 0x4, offset = 0x4, fixed_abs, tag = 'smem constant byte address 0x4 - core index']
  #allocation1 [shape = 'u32[144,128]{1,0:T(1,128)}', space=vmem, size = 0x12000, scoped, tag = 'internal scratch']
  %s0 = inlined_call_operand.vmem [shape: f32[16,512], index: 0, kind: input, shape index: {}]
  %s1 = inlined_call_operand.vmem [shape: f32[16,1], index: 1, kind: output, shape index: {0}]
  %s2 = inlined_call_operand.vmem [shape: f32[16,1], index: 2, kind: output, shape index: {1}]
  %3 = xla_tuple %s1, %s2
  %s4 = sld [smem:[#allocation0]]
  $region26: #{_nonblank_span.2} parent=0
    _
  %s6 = ssub.s32 1, %s4
  %s7 = scalar_select 0, %s6, %s4
  // Predicated region
  $region2: #{_nonblank_span.2} parent=0 // pred_check
    _
  $region3: #{_nonblank_span.2} parent=0 // pred_check_branch
    %9 = sbr.rel (0) target = $region5
  $region4: #{_nonblank_span.2} parent=0 // pred_region
    _
  $region5: #{_nonblank_span.2} parent=0 // pred_fallthru
    _
  %p10 = scmp.eq.s32.totalorder 0, 0
  // Predicated region
  $region6: #{_nonblank_span.2} parent=0 // pred_check
    %p11 = pneg %p10
  $region7: #{_nonblank_span.2} parent=0 // pred_check_branch
    %13 = sbr.rel (%p11) target = $region9
  $region8: #{_nonblank_span.2} parent=0 // pred_region
    %vm14 = vcmask 7168
    %15 = vst.msk [vmem:[%s1] sm:$0xff] %vm14, 0.0
    %16 = vst.msk [vmem:[%s1 + $0x8] sm:$0xff] %vm14, 0.0
    %17 = vst.msk [vmem:[%s2] sm:$0xff] %vm14, 0.0
    %18 = vst.msk [vmem:[%s2 + $0x8] sm:$0xff] %vm14, 0.0
  $region9: #{_nonblank_span.2} parent=0 // pred_fallthru
    _
  %v19 = vld [vmem:[%s0] sm:$0xff]
  %v20 = vld [vmem:[%s0 + $0x8] sm:$0xff]
  %v21 = vld [vmem:[%s0 + $0x10] sm:$0xff]
  %v22 = vld [vmem:[%s0 + $0x18] sm:$0xff]
  %v23 = vld [vmem:[%s0 + $0x20] sm:$0xff]
  %v24 = vld [vmem:[%s0 + $0x28] sm:$0xff]
  %v25 = vld [vmem:[%s0 + $0x30] sm:$0xff]
  %v26 = vld [vmem:[%s0 + $0x38] sm:$0xff]
  %s27 = smul.u32 0, 512
  %v28 = vlaneseq
  %v29 = vand.u32 %v28, 127
  %v30 = vadd.s32 %v29, 128
  %v31 = vadd.s32 %v29, 256
  %v32 = vadd.s32 %v29, 384
  %v33 = vstv %s27
  %v34 = vadd.s32 %v33, %v29
  %v35 = vadd.s32 %v33, %v30
  %v36 = vadd.s32 %v33, %v31
  %v37 = vadd.s32 %v33, %v32
  %vm38 = vcmp.lt.s32.totalorder %v34, 512
  %vm39 = vcmp.lt.s32.totalorder %v35, 512
  %vm40 = vcmp.lt.s32.totalorder %v36, 512
  %vm41 = vcmp.lt.s32.totalorder %v37, 512
  %v42 = vsel %vm38, %v19, 0.0
  %v43 = vsel %vm39, %v20, 0.0
  %v44 = vsel %vm40, %v21, 0.0
  %v45 = vsel %vm41, %v22, 0.0
  %v46 = vsel %vm38, %v23, 0.0
  %v47 = vsel %vm39, %v24, 0.0
  %v48 = vsel %vm40, %v25, 0.0
  %v49 = vsel %vm41, %v26, 0.0
  %v50 = vld [vmem:[%s1] sm:$0xff]
  %v51 = vld [vmem:[%s1 + $0x8] sm:$0xff]
  %v52 = vadd.f32 %v42, %v43
  %v53 = vadd.f32 %v52, %v44
  %v54 = vadd.f32 %v53, %v45
  %55 = vadd.xlane.f32.xlu0 %v54
  %v56 = vpop.xlane.xlu0 %55
  %v57 = vadd.f32 %v46, %v47
  %v58 = vadd.f32 %v57, %v48
  %v59 = vadd.f32 %v58, %v49
  %60 = vadd.xlane.f32.xlu0 %v59
  %v61 = vpop.xlane.xlu0 %60
  %v62 = vadd.f32 %v50, %v56
  %v63 = vadd.f32 %v51, %v61
  %vm64 = vcmask 7168
  %65 = vst.msk [vmem:[%s1] sm:$0xff] %vm64, %v62
  %66 = vst.msk [vmem:[%s1 + $0x8] sm:$0xff] %vm64, %v63
  %v67 = vld [vmem:[%s2] sm:$0xff]
  %v68 = vld [vmem:[%s2 + $0x8] sm:$0xff]
  %v69 = vmul.f32 %v42, %v42
  %v70 = vmul.f32 %v43, %v43
  %v71 = vmul.f32 %v44, %v44
  %v72 = vmul.f32 %v45, %v45
  %v73 = vmul.f32 %v46, %v46
  %v74 = vmul.f32 %v47, %v47
  %v75 = vmul.f32 %v48, %v48
  %v76 = vmul.f32 %v49, %v49
  %v77 = vadd.f32 %v69, %v70
  %v78 = vadd.f32 %v77, %v71
  %v79 = vadd.f32 %v78, %v72
  %80 = vadd.xlane.f32.xlu0 %v79
  %v81 = vpop.xlane.xlu0 %80
  %v82 = vadd.f32 %v73, %v74
  %v83 = vadd.f32 %v82, %v75
  %v84 = vadd.f32 %v83, %v76
  %85 = vadd.xlane.f32.xlu0 %v84
  %v86 = vpop.xlane.xlu0 %85
  %v87 = vadd.f32 %v67, %v81
  %v88 = vadd.f32 %v68, %v86
  %89 = vst.msk [vmem:[%s2] sm:$0xff] %vm64, %v87
  %90 = vst.msk [vmem:[%s2 + $0x8] sm:$0xff] %vm64, %v88
  // Predicated region
  $region10: #{_nonblank_span.2} parent=0 // pred_check
    _
  $region11: #{_nonblank_span.2} parent=0 // pred_check_branch
    %92 = sbr.rel (0) target = $region13
  $region12: #{_nonblank_span.2} parent=0 // pred_region
    _
  $region13: #{_nonblank_span.2} parent=0 // pred_fallthru
    _
  // Predicated region
  $region14: #{_nonblank_span.2} parent=0 // pred_check
    _
  $region15: #{_nonblank_span.2} parent=0 // pred_check_branch
    %94 = sbr.rel (0) target = $region17
  $region16: #{_nonblank_span.2} parent=0 // pred_region
    _
  $region17: #{_nonblank_span.2} parent=0 // pred_fallthru
    _
  // Predicated region
  $region18: #{_nonblank_span.2} parent=0 // pred_check
    _
  $region19: #{_nonblank_span.2} parent=0 // pred_check_branch
    %96 = sbr.rel (0) target = $region21
  $region20: #{_nonblank_span.2} parent=0 // pred_region
    _
  $region21: #{_nonblank_span.2} parent=0 // pred_fallthru
    _
  // Predicated region
  $region22: #{_nonblank_span.2} parent=0 // pred_check
    _
  $region23: #{_nonblank_span.2} parent=0 // pred_check_branch
    %98 = sbr.rel (0) target = $region25
  $region24: #{_nonblank_span.2} parent=0 // pred_region
    _
  $region25: #{_nonblank_span.2} parent=0 // pred_fallthru
    _

// kernel: _nonblank_span.3
$region0: #{_nonblank_span.3}
  #allocation0 [shape = 'u32[]', space=smem, size = 0x4, offset = 0x4, fixed_abs, tag = 'smem constant byte address 0x4 - core index']
  #allocation1 [shape = 'u32[144,128]{1,0:T(1,128)}', space=vmem, size = 0x12000, scoped, tag = 'internal scratch']
  %s0 = inlined_call_operand.vmem [shape: f32[64,128], index: 0, kind: input, shape index: {}]
  %s1 = inlined_call_operand.vmem [shape: f32[64,1], index: 1, kind: input, shape index: {}]
  %s2 = inlined_call_operand.vmem [shape: f32[64,1], index: 2, kind: input, shape index: {}]
  %s3 = inlined_call_operand.vmem [shape: bf16[128,128], index: 3, kind: input, shape index: {}]
  %s4 = inlined_call_operand.vmem [shape: f32[1,128], index: 4, kind: input, shape index: {}]
  %s5 = inlined_call_operand.vmem [shape: f32[1,128], index: 5, kind: input, shape index: {}]
  %s6 = inlined_call_operand.vmem [shape: bf16[128,128], index: 6, kind: input, shape index: {}]
  %s7 = inlined_call_operand.vmem [shape: f32[1,128], index: 7, kind: input, shape index: {}]
  %s8 = inlined_call_operand.vmem [shape: s32[1,128], index: 8, kind: output, shape index: {}]
  %s9 = sld [smem:[#allocation0]]
  $region42: #{_nonblank_span.3} parent=0
    _
  %s11 = ssub.s32 1, %s9
  %s12 = scalar_select 0, %s11, %s9
  // Predicated region
  $region2: #{_nonblank_span.3} parent=0 // pred_check
    _
  $region3: #{_nonblank_span.3} parent=0 // pred_check_branch
    %14 = sbr.rel (0) target = $region5
  $region4: #{_nonblank_span.3} parent=0 // pred_region
    _
  $region5: #{_nonblank_span.3} parent=0 // pred_fallthru
    _
  // Predicated region
  $region6: #{_nonblank_span.3} parent=0 // pred_check
    _
  $region7: #{_nonblank_span.3} parent=0 // pred_check_branch
    %16 = sbr.rel (0) target = $region9
  $region8: #{_nonblank_span.3} parent=0 // pred_region
    _
  $region9: #{_nonblank_span.3} parent=0 // pred_fallthru
    _
  // Predicated region
  $region10: #{_nonblank_span.3} parent=0 // pred_check
    _
  $region11: #{_nonblank_span.3} parent=0 // pred_check_branch
    %18 = sbr.rel (0) target = $region13
  $region12: #{_nonblank_span.3} parent=0 // pred_region
    _
  $region13: #{_nonblank_span.3} parent=0 // pred_fallthru
    _
  // Predicated region
  $region14: #{_nonblank_span.3} parent=0 // pred_check
    _
  $region15: #{_nonblank_span.3} parent=0 // pred_check_branch
    %20 = sbr.rel (0) target = $region17
  $region16: #{_nonblank_span.3} parent=0 // pred_region
    _
  $region17: #{_nonblank_span.3} parent=0 // pred_fallthru
    _
  // Predicated region
  $region18: #{_nonblank_span.3} parent=0 // pred_check
    _
  $region19: #{_nonblank_span.3} parent=0 // pred_check_branch
    %22 = sbr.rel (0) target = $region21
  $region20: #{_nonblank_span.3} parent=0 // pred_region
    _
  $region21: #{_nonblank_span.3} parent=0 // pred_fallthru
    _
  // Predicated region
  $region22: #{_nonblank_span.3} parent=0 // pred_check
    _
  $region23: #{_nonblank_span.3} parent=0 // pred_check_branch
    %24 = sbr.rel (0) target = $region25
  $region24: #{_nonblank_span.3} parent=0 // pred_region
    _
  $region25: #{_nonblank_span.3} parent=0 // pred_fallthru
    _
  // Predicated region
  $region26: #{_nonblank_span.3} parent=0 // pred_check
    _
  $region27: #{_nonblank_span.3} parent=0 // pred_check_branch
    %26 = sbr.rel (0) target = $region29
  $region28: #{_nonblank_span.3} parent=0 // pred_region
    _
  $region29: #{_nonblank_span.3} parent=0 // pred_fallthru
    _
  // Predicated region
  $region30: #{_nonblank_span.3} parent=0 // pred_check
    _
  $region31: #{_nonblank_span.3} parent=0 // pred_check_branch
    %28 = sbr.rel (0) target = $region33
  $region32: #{_nonblank_span.3} parent=0 // pred_region
    _
  $region33: #{_nonblank_span.3} parent=0 // pred_fallthru
    _
  %v30 = vld [vmem:[%s0] sm:$0xff]
  %v31 = vld [vmem:[%s0 + $0x8] sm:$0xff]
  %v32 = vld [vmem:[%s0 + $0x10] sm:$0xff]
  %v33 = vld [vmem:[%s0 + $0x18] sm:$0xff]
  %v34 = vld [vmem:[%s0 + $0x20] sm:$0xff]
  %v35 = vld [vmem:[%s0 + $0x28] sm:$0xff]
  %v36 = vld [vmem:[%s0 + $0x30] sm:$0xff]
  %v37 = vld [vmem:[%s0 + $0x38] sm:$0xff]
  %v38 = vld [vmem:[%s0 + $0x40] sm:$0xff]
  %v39 = vld [vmem:[%s0 + $0x48] sm:$0xff]
  %v40 = vld [vmem:[%s0 + $0x50] sm:$0xff]
  %v41 = vld [vmem:[%s0 + $0x58] sm:$0xff]
  %v42 = vld [vmem:[%s0 + $0x60] sm:$0xff]
  %v43 = vld [vmem:[%s0 + $0x68] sm:$0xff]
  %v44 = vld [vmem:[%s0 + $0x70] sm:$0xff]
  %v45 = vld [vmem:[%s0 + $0x78] sm:$0xff]
  %v46 = vpack.c.bf16 %v31, %v30
  %v47 = vpack.c.bf16 %v33, %v32
  %v48 = vpack.c.bf16 %v35, %v34
  %v49 = vpack.c.bf16 %v37, %v36
  %v50 = vpack.c.bf16 %v39, %v38
  %v51 = vpack.c.bf16 %v41, %v40
  %v52 = vpack.c.bf16 %v43, %v42
  %v53 = vpack.c.bf16 %v45, %v44
  %v54 = vld [vmem:[%s3] sm:$0xf]
  %v55 = vld [vmem:[%s3 + $0x4] sm:$0xf]
  %v56 = vld [vmem:[%s3 + $0x8] sm:$0xf]
  %v57 = vld [vmem:[%s3 + $0xc] sm:$0xf]
  %v58 = vld [vmem:[%s3 + $0x10] sm:$0xf]
  %v59 = vld [vmem:[%s3 + $0x14] sm:$0xf]
  %v60 = vld [vmem:[%s3 + $0x18] sm:$0xf]
  %v61 = vld [vmem:[%s3 + $0x1c] sm:$0xf]
  %v62 = vld [vmem:[%s3 + $0x20] sm:$0xf]
  %v63 = vld [vmem:[%s3 + $0x24] sm:$0xf]
  %v64 = vld [vmem:[%s3 + $0x28] sm:$0xf]
  %v65 = vld [vmem:[%s3 + $0x2c] sm:$0xf]
  %v66 = vld [vmem:[%s3 + $0x30] sm:$0xf]
  %v67 = vld [vmem:[%s3 + $0x34] sm:$0xf]
  %v68 = vld [vmem:[%s3 + $0x38] sm:$0xf]
  %v69 = vld [vmem:[%s3 + $0x3c] sm:$0xf]
  %v86 = vunpack.c.l.b16 %v54
  %v87 = vunpack.c.l.b16 %v55
  %v88 = vunpack.c.l.b16 %v56
  %v89 = vunpack.c.l.b16 %v57
  %v90 = vunpack.c.l.b16 %v58
  %v91 = vunpack.c.l.b16 %v59
  %v92 = vunpack.c.l.b16 %v60
  %v93 = vunpack.c.l.b16 %v61
  %v94 = vunpack.c.l.b16 %v62
  %v95 = vunpack.c.l.b16 %v63
  %v96 = vunpack.c.l.b16 %v64
  %v97 = vunpack.c.l.b16 %v65
  %v98 = vunpack.c.l.b16 %v66
  %v99 = vunpack.c.l.b16 %v67
  %v100 = vunpack.c.l.b16 %v68
  %v101 = vunpack.c.l.b16 %v69
  %v102 = vpack.c.b16 %v87, %v86
  %v103 = vpack.c.b16 %v89, %v88
  %v104 = vpack.c.b16 %v91, %v90
  %v105 = vpack.c.b16 %v93, %v92
  %v106 = vpack.c.b16 %v95, %v94
  %v107 = vpack.c.b16 %v97, %v96
  %v108 = vpack.c.b16 %v99, %v98
  %v109 = vpack.c.b16 %v101, %v100
  %118 = vmatprep.subr.bf16.mxu0 0
  %119 = vmatpush1.bf16.msra.mxu0 %v109
  %120 = vmatprep.subr.bf16.mxu0 0
  %121 = vmatpush1.bf16.msra.mxu0 %v108
  %122 = vmatprep.subr.bf16.mxu0 0
  %123 = vmatpush1.bf16.msra.mxu0 %v107
  %124 = vmatprep.subr.bf16.mxu0 0
  %125 = vmatpush1.bf16.msra.mxu0 %v106
  %126 = vmatprep.subr.bf16.mxu0 0
  %127 = vmatpush1.bf16.msra.mxu0 %v105
  %128 = vmatprep.subr.bf16.mxu0 0
  %129 = vmatpush1.bf16.msra.mxu0 %v104
  %130 = vmatprep.subr.bf16.mxu0 0
  %131 = vmatpush1.bf16.msra.mxu0 %v103
  %132 = vmatprep.subr.bf16.mxu0 0
  %133 = vmatpush1.bf16.msra.mxu0 %v102
  %134 = vmatprep.subr.bf16.mxu0 0
  %135 = vmatpush2.bf16.msra.mxu0 0
  %136 = vmatprep.subr.bf16.mxu0 0
  %137 = vmatpush2.bf16.msra.mxu0 0
  %138 = vmatprep.subr.bf16.mxu0 0
  %139 = vmatpush2.bf16.msra.mxu0 0
  %140 = vmatprep.subr.bf16.mxu0 0
  %141 = vmatpush2.bf16.msra.mxu0 0
  %142 = vmatprep.subr.bf16.mxu0 0
  %143 = vmatpush2.bf16.msra.mxu0 0
  %144 = vmatprep.subr.bf16.mxu0 0
  %145 = vmatpush2.bf16.msra.mxu0 0
  %146 = vmatprep.subr.bf16.mxu0 0
  %147 = vmatpush2.bf16.msra.mxu0 0
  %148 = vmatprep.subr.bf16.mxu0 0
  %149 = vmatpush2.bf16.msra.mxu0 0
  %150 = vmatprep.mubr.bf16.mxu0 0
  %151 = vmatmul.mubr.bf16.gmra.mxu0 %v46
  %v152 = vpop.f32.mrf.mxu0
  %v153 = vadd.f32 0.0, %v152
  %v154 = vpop.f32.mrf.mxu0
  %v155 = vpop.f32.mrf.mxu0
  %v156 = vadd.f32 0.0, %v155
  %v157 = vpop.f32.mrf.mxu0
  %158 = vmatprep.mubr.bf16.mxu0 0
  %159 = vmatmul.mubr.bf16.gmra.mxu0 %v47
  %v160 = vpop.f32.mrf.mxu0
  %v161 = vadd.f32 0.0, %v160
  %v162 = vpop.f32.mrf.mxu0
  %v163 = vpop.f32.mrf.mxu0
  %v164 = vadd.f32 0.0, %v163
  %v165 = vpop.f32.mrf.mxu0
  %166 = vmatprep.mubr.bf16.mxu0 0
  %167 = vmatmul.mubr.bf16.gmra.mxu0 %v48
  %v168 = vpop.f32.mrf.mxu0
  %v169 = vadd.f32 0.0, %v168
  %v170 = vpop.f32.mrf.mxu0
  %v171 = vpop.f32.mrf.mxu0
  %v172 = vadd.f32 0.0, %v171
  %v173 = vpop.f32.mrf.mxu0
  %174 = vmatprep.mubr.bf16.mxu0 0
  %175 = vmatmul.mubr.bf16.gmra.mxu0 %v49
  %v176 = vpop.f32.mrf.mxu0
  %v177 = vadd.f32 0.0, %v176
  %v178 = vpop.f32.mrf.mxu0
  %v179 = vpop.f32.mrf.mxu0
  %v180 = vadd.f32 0.0, %v179
  %v181 = vpop.f32.mrf.mxu0
  %182 = vmatprep.mubr.bf16.mxu0 0
  %183 = vmatmul.mubr.bf16.gmra.mxu0 %v50
  %v184 = vpop.f32.mrf.mxu0
  %v185 = vadd.f32 0.0, %v184
  %v186 = vpop.f32.mrf.mxu0
  %v187 = vpop.f32.mrf.mxu0
  %v188 = vadd.f32 0.0, %v187
  %v189 = vpop.f32.mrf.mxu0
  %190 = vmatprep.mubr.bf16.mxu0 0
  %191 = vmatmul.mubr.bf16.gmra.mxu0 %v51
  %v192 = vpop.f32.mrf.mxu0
  %v193 = vadd.f32 0.0, %v192
  %v194 = vpop.f32.mrf.mxu0
  %v195 = vpop.f32.mrf.mxu0
  %v196 = vadd.f32 0.0, %v195
  %v197 = vpop.f32.mrf.mxu0
  %198 = vmatprep.mubr.bf16.mxu0 0
  %199 = vmatmul.mubr.bf16.gmra.mxu0 %v52
  %v200 = vpop.f32.mrf.mxu0
  %v201 = vadd.f32 0.0, %v200
  %v202 = vpop.f32.mrf.mxu0
  %v203 = vpop.f32.mrf.mxu0
  %v204 = vadd.f32 0.0, %v203
  %v205 = vpop.f32.mrf.mxu0
  %206 = vmatprep.mubr.bf16.mxu0 0
  %207 = vmatmul.mubr.bf16.gmra.mxu0 %v53
  %v208 = vpop.f32.mrf.mxu0
  %v209 = vadd.f32 0.0, %v208
  %v210 = vpop.f32.mrf.mxu0
  %v211 = vpop.f32.mrf.mxu0
  %v212 = vadd.f32 0.0, %v211
  %v213 = vpop.f32.mrf.mxu0
  %214 = vdwg.mxu0
  %v215 = vld [vmem:[%s1] sm:$0xff]
  %v216 = vld [vmem:[%s1 + $0x8] sm:$0xff]
  %v217 = vld [vmem:[%s1 + $0x10] sm:$0xff]
  %v218 = vld [vmem:[%s1 + $0x18] sm:$0xff]
  %v219 = vld [vmem:[%s1 + $0x20] sm:$0xff]
  %v220 = vld [vmem:[%s1 + $0x28] sm:$0xff]
  %v221 = vld [vmem:[%s1 + $0x30] sm:$0xff]
  %v222 = vld [vmem:[%s1 + $0x38] sm:$0xff]
  %v223 = vld [vmem:[%s1 + $0x40] sm:$0xff]
  %v224 = vld [vmem:[%s1 + $0x48] sm:$0xff]
  %v225 = vld [vmem:[%s1 + $0x50] sm:$0xff]
  %v226 = vld [vmem:[%s1 + $0x58] sm:$0xff]
  %v227 = vld [vmem:[%s1 + $0x60] sm:$0xff]
  %v228 = vld [vmem:[%s1 + $0x68] sm:$0xff]
  %v229 = vld [vmem:[%s1 + $0x70] sm:$0xff]
  %v230 = vld [vmem:[%s1 + $0x78] sm:$0xff]
  %232 = vset.pattern.permute.xlu0 0
  %233 = vperm.xlu0 %232, %v215
  %v234 = vpop.permute.xlu0 %233
  %237 = vset.pattern.permute.xlu0 0
  %238 = vperm.xlu0 %237, %v216
  %v239 = vpop.permute.xlu0 %238
  %242 = vset.pattern.permute.xlu0 0
  %243 = vperm.xlu0 %242, %v217
  %v244 = vpop.permute.xlu0 %243
  %247 = vset.pattern.permute.xlu0 0
  %248 = vperm.xlu0 %247, %v218
  %v249 = vpop.permute.xlu0 %248
  %252 = vset.pattern.permute.xlu0 0
  %253 = vperm.xlu0 %252, %v219
  %v254 = vpop.permute.xlu0 %253
  %257 = vset.pattern.permute.xlu0 0
  %258 = vperm.xlu0 %257, %v220
  %v259 = vpop.permute.xlu0 %258
  %262 = vset.pattern.permute.xlu0 0
  %263 = vperm.xlu0 %262, %v221
  %v264 = vpop.permute.xlu0 %263
  %267 = vset.pattern.permute.xlu0 0
  %268 = vperm.xlu0 %267, %v222
  %v269 = vpop.permute.xlu0 %268
  %272 = vset.pattern.permute.xlu0 0
  %273 = vperm.xlu0 %272, %v223
  %v274 = vpop.permute.xlu0 %273
  %277 = vset.pattern.permute.xlu0 0
  %278 = vperm.xlu0 %277, %v224
  %v279 = vpop.permute.xlu0 %278
  %282 = vset.pattern.permute.xlu0 0
  %283 = vperm.xlu0 %282, %v225
  %v284 = vpop.permute.xlu0 %283
  %287 = vset.pattern.permute.xlu0 0
  %288 = vperm.xlu0 %287, %v226
  %v289 = vpop.permute.xlu0 %288
  %292 = vset.pattern.permute.xlu0 0
  %293 = vperm.xlu0 %292, %v227
  %v294 = vpop.permute.xlu0 %293
  %297 = vset.pattern.permute.xlu0 0
  %298 = vperm.xlu0 %297, %v228
  %v299 = vpop.permute.xlu0 %298
  %302 = vset.pattern.permute.xlu0 0
  %303 = vperm.xlu0 %302, %v229
  %v304 = vpop.permute.xlu0 %303
  %307 = vset.pattern.permute.xlu0 0
  %308 = vperm.xlu0 %307, %v230
  %v309 = vpop.permute.xlu0 %308
  %v311 = vmul.f32 %v234, %v153
  %v312 = vmul.f32 %v239, %v156
  %v313 = vmul.f32 %v244, %v161
  %v314 = vmul.f32 %v249, %v164
  %v315 = vmul.f32 %v254, %v169
  %v316 = vmul.f32 %v259, %v172
  %v317 = vmul.f32 %v264, %v177
  %v318 = vmul.f32 %v269, %v180
  %v319 = vmul.f32 %v274, %v185
  %v320 = vmul.f32 %v279, %v188
  %v321 = vmul.f32 %v284, %v193
  %v322 = vmul.f32 %v289, %v196
  %v323 = vmul.f32 %v294, %v201
  %v324 = vmul.f32 %v299, %v204
  %v325 = vmul.f32 %v304, %v209
  %v326 = vmul.f32 %v309, %v212
  %v327 = vld [vmem:[%s2] sm:$0xff]
  %v328 = vld [vmem:[%s2 + $0x8] sm:$0xff]
  %v329 = vld [vmem:[%s2 + $0x10] sm:$0xff]
  %v330 = vld [vmem:[%s2 + $0x18] sm:$0xff]
  %v331 = vld [vmem:[%s2 + $0x20] sm:$0xff]
  %v332 = vld [vmem:[%s2 + $0x28] sm:$0xff]
  %v333 = vld [vmem:[%s2 + $0x30] sm:$0xff]
  %v334 = vld [vmem:[%s2 + $0x38] sm:$0xff]
  %v335 = vld [vmem:[%s2 + $0x40] sm:$0xff]
  %v336 = vld [vmem:[%s2 + $0x48] sm:$0xff]
  %v337 = vld [vmem:[%s2 + $0x50] sm:$0xff]
  %v338 = vld [vmem:[%s2 + $0x58] sm:$0xff]
  %v339 = vld [vmem:[%s2 + $0x60] sm:$0xff]
  %v340 = vld [vmem:[%s2 + $0x68] sm:$0xff]
  %v341 = vld [vmem:[%s2 + $0x70] sm:$0xff]
  %v342 = vld [vmem:[%s2 + $0x78] sm:$0xff]
  %v343 = vld [vmem:[%s4] sm:$0x1]
  %345 = vset.pattern.permute.xlu0 0
  %346 = vperm.xlu0 %345, %v327
  %v347 = vpop.permute.xlu0 %346
  %350 = vset.pattern.permute.xlu0 0
  %351 = vperm.xlu0 %350, %v328
  %v352 = vpop.permute.xlu0 %351
  %355 = vset.pattern.permute.xlu0 0
  %356 = vperm.xlu0 %355, %v329
  %v357 = vpop.permute.xlu0 %356
  %360 = vset.pattern.permute.xlu0 0
  %361 = vperm.xlu0 %360, %v330
  %v362 = vpop.permute.xlu0 %361
  %365 = vset.pattern.permute.xlu0 0
  %366 = vperm.xlu0 %365, %v331
  %v367 = vpop.permute.xlu0 %366
  %370 = vset.pattern.permute.xlu0 0
  %371 = vperm.xlu0 %370, %v332
  %v372 = vpop.permute.xlu0 %371
  %375 = vset.pattern.permute.xlu0 0
  %376 = vperm.xlu0 %375, %v333
  %v377 = vpop.permute.xlu0 %376
  %380 = vset.pattern.permute.xlu0 0
  %381 = vperm.xlu0 %380, %v334
  %v382 = vpop.permute.xlu0 %381
  %385 = vset.pattern.permute.xlu0 0
  %386 = vperm.xlu0 %385, %v335
  %v387 = vpop.permute.xlu0 %386
  %390 = vset.pattern.permute.xlu0 0
  %391 = vperm.xlu0 %390, %v336
  %v392 = vpop.permute.xlu0 %391
  %395 = vset.pattern.permute.xlu0 0
  %396 = vperm.xlu0 %395, %v337
  %v397 = vpop.permute.xlu0 %396
  %400 = vset.pattern.permute.xlu0 0
  %401 = vperm.xlu0 %400, %v338
  %v402 = vpop.permute.xlu0 %401
  %405 = vset.pattern.permute.xlu0 0
  %406 = vperm.xlu0 %405, %v339
  %v407 = vpop.permute.xlu0 %406
  %410 = vset.pattern.permute.xlu0 0
  %411 = vperm.xlu0 %410, %v340
  %v412 = vpop.permute.xlu0 %411
  %415 = vset.pattern.permute.xlu0 0
  %416 = vperm.xlu0 %415, %v341
  %v417 = vpop.permute.xlu0 %416
  %420 = vset.pattern.permute.xlu0 0
  %421 = vperm.xlu0 %420, %v342
  %v422 = vpop.permute.xlu0 %421
  %v425 = vlaneseq
  %v426 = vshrl.u32 %v425, 7
  %v427 = vsub.s32 0, %v426
  %v428 = vrot.slane %v343, %v427
  %v430 = vmul.f32 %v347, %v428
  %v431 = vmul.f32 %v352, %v428
  %v432 = vmul.f32 %v357, %v428
  %v433 = vmul.f32 %v362, %v428
  %v434 = vmul.f32 %v367, %v428
  %v435 = vmul.f32 %v372, %v428
  %v436 = vmul.f32 %v377, %v428
  %v437 = vmul.f32 %v382, %v428
  %v438 = vmul.f32 %v387, %v428
  %v439 = vmul.f32 %v392, %v428
  %v440 = vmul.f32 %v397, %v428
  %v441 = vmul.f32 %v402, %v428
  %v442 = vmul.f32 %v407, %v428
  %v443 = vmul.f32 %v412, %v428
  %v444 = vmul.f32 %v417, %v428
  %v445 = vmul.f32 %v422, %v428
  %v446 = vadd.f32 %v311, %v430
  %v447 = vadd.f32 %v312, %v431
  %v448 = vadd.f32 %v313, %v432
  %v449 = vadd.f32 %v314, %v433
  %v450 = vadd.f32 %v315, %v434
  %v451 = vadd.f32 %v316, %v435
  %v452 = vadd.f32 %v317, %v436
  %v453 = vadd.f32 %v318, %v437
  %v454 = vadd.f32 %v319, %v438
  %v455 = vadd.f32 %v320, %v439
  %v456 = vadd.f32 %v321, %v440
  %v457 = vadd.f32 %v322, %v441
  %v458 = vadd.f32 %v323, %v442
  %v459 = vadd.f32 %v324, %v443
  %v460 = vadd.f32 %v325, %v444
  %v461 = vadd.f32 %v326, %v445
  %v462 = vld [vmem:[%s5] sm:$0x1]
  %v464 = vlaneseq
  %v465 = vshrl.u32 %v464, 7
  %v466 = vsub.s32 0, %v465
  %v467 = vrot.slane %v462, %v466
  %v469 = vadd.f32 %v446, %v467
  %v470 = vadd.f32 %v447, %v467
  %v471 = vadd.f32 %v448, %v467
  %v472 = vadd.f32 %v449, %v467
  %v473 = vadd.f32 %v450, %v467
  %v474 = vadd.f32 %v451, %v467
  %v475 = vadd.f32 %v452, %v467
  %v476 = vadd.f32 %v453, %v467
  %v477 = vadd.f32 %v454, %v467
  %v478 = vadd.f32 %v455, %v467
  %v479 = vadd.f32 %v456, %v467
  %v480 = vadd.f32 %v457, %v467
  %v481 = vadd.f32 %v458, %v467
  %v482 = vadd.f32 %v459, %v467
  %v483 = vadd.f32 %v460, %v467
  %v484 = vadd.f32 %v461, %v467
  %v485 = vmul.f32 %v469, %v469
  %v486 = vmul.f32 %v470, %v470
  %v487 = vmul.f32 %v471, %v471
  %v488 = vmul.f32 %v472, %v472
  %v489 = vmul.f32 %v473, %v473
  %v490 = vmul.f32 %v474, %v474
  %v491 = vmul.f32 %v475, %v475
  %v492 = vmul.f32 %v476, %v476
  %v493 = vmul.f32 %v477, %v477
  %v494 = vmul.f32 %v478, %v478
  %v495 = vmul.f32 %v479, %v479
  %v496 = vmul.f32 %v480, %v480
  %v497 = vmul.f32 %v481, %v481
  %v498 = vmul.f32 %v482, %v482
  %v499 = vmul.f32 %v483, %v483
  %v500 = vmul.f32 %v484, %v484
  %v501 = vmul.f32 %v469, %v485
  %v502 = vmul.f32 %v470, %v486
  %v503 = vmul.f32 %v471, %v487
  %v504 = vmul.f32 %v472, %v488
  %v505 = vmul.f32 %v473, %v489
  %v506 = vmul.f32 %v474, %v490
  %v507 = vmul.f32 %v475, %v491
  %v508 = vmul.f32 %v476, %v492
  %v509 = vmul.f32 %v477, %v493
  %v510 = vmul.f32 %v478, %v494
  %v511 = vmul.f32 %v479, %v495
  %v512 = vmul.f32 %v480, %v496
  %v513 = vmul.f32 %v481, %v497
  %v514 = vmul.f32 %v482, %v498
  %v515 = vmul.f32 %v483, %v499
  %v516 = vmul.f32 %v484, %v500
  %v517 = vmul.f32 %v501, 0.044715
  %v518 = vmul.f32 %v502, 0.044715
  %v519 = vmul.f32 %v503, 0.044715
  %v520 = vmul.f32 %v504, 0.044715
  %v521 = vmul.f32 %v505, 0.044715
  %v522 = vmul.f32 %v506, 0.044715
  %v523 = vmul.f32 %v507, 0.044715
  %v524 = vmul.f32 %v508, 0.044715
  %v525 = vmul.f32 %v509, 0.044715
  %v526 = vmul.f32 %v510, 0.044715
  %v527 = vmul.f32 %v511, 0.044715
  %v528 = vmul.f32 %v512, 0.044715
  %v529 = vmul.f32 %v513, 0.044715
  %v530 = vmul.f32 %v514, 0.044715
  %v531 = vmul.f32 %v515, 0.044715
  %v532 = vmul.f32 %v516, 0.044715
  %v533 = vadd.f32 %v469, %v517
  %v534 = vadd.f32 %v470, %v518
  %v535 = vadd.f32 %v471, %v519
  %v536 = vadd.f32 %v472, %v520
  %v537 = vadd.f32 %v473, %v521
  %v538 = vadd.f32 %v474, %v522
  %v539 = vadd.f32 %v475, %v523
  %v540 = vadd.f32 %v476, %v524
  %v541 = vadd.f32 %v477, %v525
  %v542 = vadd.f32 %v478, %v526
  %v543 = vadd.f32 %v479, %v527
  %v544 = vadd.f32 %v480, %v528
  %v545 = vadd.f32 %v481, %v529
  %v546 = vadd.f32 %v482, %v530
  %v547 = vadd.f32 %v483, %v531
  %v548 = vadd.f32 %v484, %v532
  %v549 = vmul.f32 %v533, 0.7978846
  %v550 = vmul.f32 %v534, 0.7978846
  %v551 = vmul.f32 %v535, 0.7978846
  %v552 = vmul.f32 %v536, 0.7978846
  %v553 = vmul.f32 %v537, 0.7978846
  %v554 = vmul.f32 %v538, 0.7978846
  %v555 = vmul.f32 %v539, 0.7978846
  %v556 = vmul.f32 %v540, 0.7978846
  %v557 = vmul.f32 %v541, 0.7978846
  %v558 = vmul.f32 %v542, 0.7978846
  %v559 = vmul.f32 %v543, 0.7978846
  %v560 = vmul.f32 %v544, 0.7978846
  %v561 = vmul.f32 %v545, 0.7978846
  %v562 = vmul.f32 %v546, 0.7978846
  %v563 = vmul.f32 %v547, 0.7978846
  %v564 = vmul.f32 %v548, 0.7978846
  %v565 = vtanh.pop %v549
  %v566 = vtanh.pop %v550
  %v567 = vtanh.pop %v551
  %v568 = vtanh.pop %v552
  %v569 = vtanh.pop %v553
  %v570 = vtanh.pop %v554
  %v571 = vtanh.pop %v555
  %v572 = vtanh.pop %v556
  %v573 = vtanh.pop %v557
  %v574 = vtanh.pop %v558
  %v575 = vtanh.pop %v559
  %v576 = vtanh.pop %v560
  %v577 = vtanh.pop %v561
  %v578 = vtanh.pop %v562
  %v579 = vtanh.pop %v563
  %v580 = vtanh.pop %v564
  %v581 = vadd.f32 %v565, 1.0
  %v582 = vadd.f32 %v566, 1.0
  %v583 = vadd.f32 %v567, 1.0
  %v584 = vadd.f32 %v568, 1.0
  %v585 = vadd.f32 %v569, 1.0
  %v586 = vadd.f32 %v570, 1.0
  %v587 = vadd.f32 %v571, 1.0
  %v588 = vadd.f32 %v572, 1.0
  %v589 = vadd.f32 %v573, 1.0
  %v590 = vadd.f32 %v574, 1.0
  %v591 = vadd.f32 %v575, 1.0
  %v592 = vadd.f32 %v576, 1.0
  %v593 = vadd.f32 %v577, 1.0
  %v594 = vadd.f32 %v578, 1.0
  %v595 = vadd.f32 %v579, 1.0
  %v596 = vadd.f32 %v580, 1.0
  %v597 = vmul.f32 %v581, 0.5
  %v598 = vmul.f32 %v582, 0.5
  %v599 = vmul.f32 %v583, 0.5
  %v600 = vmul.f32 %v584, 0.5
  %v601 = vmul.f32 %v585, 0.5
  %v602 = vmul.f32 %v586, 0.5
  %v603 = vmul.f32 %v587, 0.5
  %v604 = vmul.f32 %v588, 0.5
  %v605 = vmul.f32 %v589, 0.5
  %v606 = vmul.f32 %v590, 0.5
  %v607 = vmul.f32 %v591, 0.5
  %v608 = vmul.f32 %v592, 0.5
  %v609 = vmul.f32 %v593, 0.5
  %v610 = vmul.f32 %v594, 0.5
  %v611 = vmul.f32 %v595, 0.5
  %v612 = vmul.f32 %v596, 0.5
  %v613 = vmul.f32 %v469, %v597
  %v614 = vmul.f32 %v470, %v598
  %v615 = vmul.f32 %v471, %v599
  %v616 = vmul.f32 %v472, %v600
  %v617 = vmul.f32 %v473, %v601
  %v618 = vmul.f32 %v474, %v602
  %v619 = vmul.f32 %v475, %v603
  %v620 = vmul.f32 %v476, %v604
  %v621 = vmul.f32 %v477, %v605
  %v622 = vmul.f32 %v478, %v606
  %v623 = vmul.f32 %v479, %v607
  %v624 = vmul.f32 %v480, %v608
  %v625 = vmul.f32 %v481, %v609
  %v626 = vmul.f32 %v482, %v610
  %v627 = vmul.f32 %v483, %v611
  %v628 = vmul.f32 %v484, %v612
  %v629 = vpack.c.bf16 %v614, %v613
  %v630 = vpack.c.bf16 %v616, %v615
  %v631 = vpack.c.bf16 %v618, %v617
  %v632 = vpack.c.bf16 %v620, %v619
  %v633 = vpack.c.bf16 %v622, %v621
  %v634 = vpack.c.bf16 %v624, %v623
  %v635 = vpack.c.bf16 %v626, %v625
  %v636 = vpack.c.bf16 %v628, %v627
  %v637 = vld [vmem:[%s6] sm:$0xf]
  %v638 = vld [vmem:[%s6 + $0x4] sm:$0xf]
  %v639 = vld [vmem:[%s6 + $0x8] sm:$0xf]
  %v640 = vld [vmem:[%s6 + $0xc] sm:$0xf]
  %v641 = vld [vmem:[%s6 + $0x10] sm:$0xf]
  %v642 = vld [vmem:[%s6 + $0x14] sm:$0xf]
  %v643 = vld [vmem:[%s6 + $0x18] sm:$0xf]
  %v644 = vld [vmem:[%s6 + $0x1c] sm:$0xf]
  %v645 = vld [vmem:[%s6 + $0x20] sm:$0xf]
  %v646 = vld [vmem:[%s6 + $0x24] sm:$0xf]
  %v647 = vld [vmem:[%s6 + $0x28] sm:$0xf]
  %v648 = vld [vmem:[%s6 + $0x2c] sm:$0xf]
  %v649 = vld [vmem:[%s6 + $0x30] sm:$0xf]
  %v650 = vld [vmem:[%s6 + $0x34] sm:$0xf]
  %v651 = vld [vmem:[%s6 + $0x38] sm:$0xf]
  %v652 = vld [vmem:[%s6 + $0x3c] sm:$0xf]
  %v653 = vld [vmem:[%s7] sm:$0x1]
  %v655 = vlaneseq
  %v656 = vshrl.u32 %v655, 7
  %v657 = vsub.s32 0, %v656
  %v658 = vrot.slane %v653, %v657
  %v676 = vunpack.c.l.b16 %v637
  %v677 = vunpack.c.l.b16 %v638
  %v678 = vunpack.c.l.b16 %v639
  %v679 = vunpack.c.l.b16 %v640
  %v680 = vunpack.c.l.b16 %v641
  %v681 = vunpack.c.l.b16 %v642
  %v682 = vunpack.c.l.b16 %v643
  %v683 = vunpack.c.l.b16 %v644
  %v684 = vunpack.c.l.b16 %v645
  %v685 = vunpack.c.l.b16 %v646
  %v686 = vunpack.c.l.b16 %v647
  %v687 = vunpack.c.l.b16 %v648
  %v688 = vunpack.c.l.b16 %v649
  %v689 = vunpack.c.l.b16 %v650
  %v690 = vunpack.c.l.b16 %v651
  %v691 = vunpack.c.l.b16 %v652
  %v692 = vpack.c.b16 %v677, %v676
  %v693 = vpack.c.b16 %v679, %v678
  %v694 = vpack.c.b16 %v681, %v680
  %v695 = vpack.c.b16 %v683, %v682
  %v696 = vpack.c.b16 %v685, %v684
  %v697 = vpack.c.b16 %v687, %v686
  %v698 = vpack.c.b16 %v689, %v688
  %v699 = vpack.c.b16 %v691, %v690
  %708 = vmatprep.subr.bf16.mxu0 0
  %709 = vmatpush1.bf16.msra.mxu0 %v699
  %710 = vmatprep.subr.bf16.mxu0 0
  %711 = vmatpush1.bf16.msra.mxu0 %v698
  %712 = vmatprep.subr.bf16.mxu0 0
  %713 = vmatpush1.bf16.msra.mxu0 %v697
  %714 = vmatprep.subr.bf16.mxu0 0
  %715 = vmatpush1.bf16.msra.mxu0 %v696
  %716 = vmatprep.subr.bf16.mxu0 0
  %717 = vmatpush1.bf16.msra.mxu0 %v695
  %718 = vmatprep.subr.bf16.mxu0 0
  %719 = vmatpush1.bf16.msra.mxu0 %v694
  %720 = vmatprep.subr.bf16.mxu0 0
  %721 = vmatpush1.bf16.msra.mxu0 %v693
  %722 = vmatprep.subr.bf16.mxu0 0
  %723 = vmatpush1.bf16.msra.mxu0 %v692
  %724 = vmatprep.subr.bf16.mxu0 0
  %725 = vmatpush2.bf16.msra.mxu0 0
  %726 = vmatprep.subr.bf16.mxu0 0
  %727 = vmatpush2.bf16.msra.mxu0 0
  %728 = vmatprep.subr.bf16.mxu0 0
  %729 = vmatpush2.bf16.msra.mxu0 0
  %730 = vmatprep.subr.bf16.mxu0 0
  %731 = vmatpush2.bf16.msra.mxu0 0
  %732 = vmatprep.subr.bf16.mxu0 0
  %733 = vmatpush2.bf16.msra.mxu0 0
  %734 = vmatprep.subr.bf16.mxu0 0
  %735 = vmatpush2.bf16.msra.mxu0 0
  %736 = vmatprep.subr.bf16.mxu0 0
  %737 = vmatpush2.bf16.msra.mxu0 0
  %738 = vmatprep.subr.bf16.mxu0 0
  %739 = vmatpush2.bf16.msra.mxu0 0
  %740 = vmatprep.mubr.bf16.mxu0 0
  %741 = vmatmul.mubr.bf16.gmra.mxu0 %v629
  %v742 = vpop.f32.mrf.mxu0
  %v743 = vadd.f32 %v658, %v742
  %v744 = vpop.f32.mrf.mxu0
  %v745 = vpop.f32.mrf.mxu0
  %v746 = vadd.f32 %v658, %v745
  %v747 = vpop.f32.mrf.mxu0
  %748 = vmatprep.mubr.bf16.mxu0 0
  %749 = vmatmul.mubr.bf16.gmra.mxu0 %v630
  %v750 = vpop.f32.mrf.mxu0
  %v751 = vadd.f32 %v658, %v750
  %v752 = vpop.f32.mrf.mxu0
  %v753 = vpop.f32.mrf.mxu0
  %v754 = vadd.f32 %v658, %v753
  %v755 = vpop.f32.mrf.mxu0
  %756 = vmatprep.mubr.bf16.mxu0 0
  %757 = vmatmul.mubr.bf16.gmra.mxu0 %v631
  %v758 = vpop.f32.mrf.mxu0
  %v759 = vadd.f32 %v658, %v758
  %v760 = vpop.f32.mrf.mxu0
  %v761 = vpop.f32.mrf.mxu0
  %v762 = vadd.f32 %v658, %v761
  %v763 = vpop.f32.mrf.mxu0
  %764 = vmatprep.mubr.bf16.mxu0 0
  %765 = vmatmul.mubr.bf16.gmra.mxu0 %v632
  %v766 = vpop.f32.mrf.mxu0
  %v767 = vadd.f32 %v658, %v766
  %v768 = vpop.f32.mrf.mxu0
  %v769 = vpop.f32.mrf.mxu0
  %v770 = vadd.f32 %v658, %v769
  %v771 = vpop.f32.mrf.mxu0
  %772 = vmatprep.mubr.bf16.mxu0 0
  %773 = vmatmul.mubr.bf16.gmra.mxu0 %v633
  %v774 = vpop.f32.mrf.mxu0
  %v775 = vadd.f32 %v658, %v774
  %v776 = vpop.f32.mrf.mxu0
  %v777 = vpop.f32.mrf.mxu0
  %v778 = vadd.f32 %v658, %v777
  %v779 = vpop.f32.mrf.mxu0
  %780 = vmatprep.mubr.bf16.mxu0 0
  %781 = vmatmul.mubr.bf16.gmra.mxu0 %v634
  %v782 = vpop.f32.mrf.mxu0
  %v783 = vadd.f32 %v658, %v782
  %v784 = vpop.f32.mrf.mxu0
  %v785 = vpop.f32.mrf.mxu0
  %v786 = vadd.f32 %v658, %v785
  %v787 = vpop.f32.mrf.mxu0
  %788 = vmatprep.mubr.bf16.mxu0 0
  %789 = vmatmul.mubr.bf16.gmra.mxu0 %v635
  %v790 = vpop.f32.mrf.mxu0
  %v791 = vadd.f32 %v658, %v790
  %v792 = vpop.f32.mrf.mxu0
  %v793 = vpop.f32.mrf.mxu0
  %v794 = vadd.f32 %v658, %v793
  %v795 = vpop.f32.mrf.mxu0
  %796 = vmatprep.mubr.bf16.mxu0 0
  %797 = vmatmul.mubr.bf16.gmra.mxu0 %v636
  %v798 = vpop.f32.mrf.mxu0
  %v799 = vadd.f32 %v658, %v798
  %v800 = vpop.f32.mrf.mxu0
  %v801 = vpop.f32.mrf.mxu0
  %v802 = vadd.f32 %v658, %v801
  %v803 = vpop.f32.mrf.mxu0
  %804 = vdwg.mxu0
  %805 = vmax.xlane.f32.xlu0 %v743
  %v806 = vpop.xlane.xlu0 %805
  %807 = vmax.xlane.f32.xlu0 %v746
  %v808 = vpop.xlane.xlu0 %807
  %809 = vmax.xlane.f32.xlu0 %v751
  %v810 = vpop.xlane.xlu0 %809
  %811 = vmax.xlane.f32.xlu0 %v754
  %v812 = vpop.xlane.xlu0 %811
  %813 = vmax.xlane.f32.xlu0 %v759
  %v814 = vpop.xlane.xlu0 %813
  %815 = vmax.xlane.f32.xlu0 %v762
  %v816 = vpop.xlane.xlu0 %815
  %817 = vmax.xlane.f32.xlu0 %v767
  %v818 = vpop.xlane.xlu0 %817
  %819 = vmax.xlane.f32.xlu0 %v770
  %v820 = vpop.xlane.xlu0 %819
  %821 = vmax.xlane.f32.xlu0 %v775
  %v822 = vpop.xlane.xlu0 %821
  %823 = vmax.xlane.f32.xlu0 %v778
  %v824 = vpop.xlane.xlu0 %823
  %825 = vmax.xlane.f32.xlu0 %v783
  %v826 = vpop.xlane.xlu0 %825
  %827 = vmax.xlane.f32.xlu0 %v786
  %v828 = vpop.xlane.xlu0 %827
  %829 = vmax.xlane.f32.xlu0 %v791
  %v830 = vpop.xlane.xlu0 %829
  %831 = vmax.xlane.f32.xlu0 %v794
  %v832 = vpop.xlane.xlu0 %831
  %833 = vmax.xlane.f32.xlu0 %v799
  %v834 = vpop.xlane.xlu0 %833
  %835 = vmax.xlane.f32.xlu0 %v802
  %v836 = vpop.xlane.xlu0 %835
  %v837 = vlaneseq
  %v838 = vand.u32 %v837, 127
  %vm839 = vcmp.eq.f32.partialorder %v743, %v806
  %vm840 = vcmp.eq.f32.partialorder %v746, %v808
  %vm841 = vcmp.eq.f32.partialorder %v751, %v810
  %vm842 = vcmp.eq.f32.partialorder %v754, %v812
  %vm843 = vcmp.eq.f32.partialorder %v759, %v814
  %vm844 = vcmp.eq.f32.partialorder %v762, %v816
  %vm845 = vcmp.eq.f32.partialorder %v767, %v818
  %vm846 = vcmp.eq.f32.partialorder %v770, %v820
  %vm847 = vcmp.eq.f32.partialorder %v775, %v822
  %vm848 = vcmp.eq.f32.partialorder %v778, %v824
  %vm849 = vcmp.eq.f32.partialorder %v783, %v826
  %vm850 = vcmp.eq.f32.partialorder %v786, %v828
  %vm851 = vcmp.eq.f32.partialorder %v791, %v830
  %vm852 = vcmp.eq.f32.partialorder %v794, %v832
  %vm853 = vcmp.eq.f32.partialorder %v799, %v834
  %vm854 = vcmp.eq.f32.partialorder %v802, %v836
  %v855 = vsel %vm839, %v838, 128
  %v856 = vsel %vm840, %v838, 128
  %v857 = vsel %vm841, %v838, 128
  %v858 = vsel %vm842, %v838, 128
  %v859 = vsel %vm843, %v838, 128
  %v860 = vsel %vm844, %v838, 128
  %v861 = vsel %vm845, %v838, 128
  %v862 = vsel %vm846, %v838, 128
  %v863 = vsel %vm847, %v838, 128
  %v864 = vsel %vm848, %v838, 128
  %v865 = vsel %vm849, %v838, 128
  %v866 = vsel %vm850, %v838, 128
  %v867 = vsel %vm851, %v838, 128
  %v868 = vsel %vm852, %v838, 128
  %v869 = vsel %vm853, %v838, 128
  %v870 = vsel %vm854, %v838, 128
  %v871 = vand.u32 %v855, 65535
  %v872 = vshra.s32 %v855, 16
  %v873 = vcvt.s32.f32 %v871
  %v874 = vcvt.s32.f32 %v872
  %875 = vmin.xlane.f32.xlu0 %v874
  %v876 = vpop.xlane.xlu0 %875
  %vm877 = vcmp.eq.f32.partialorder %v874, %v876
  %v878 = vsel %vm877, %v873, inf
  %879 = vmin.xlane.f32.xlu0 %v878
  %v880 = vpop.xlane.xlu0 %879
  %v881 = vcvt.f32.s32 %v880
  %v882 = vcvt.f32.s32 %v876
  %v883 = vshll.u32 %v882, 16
  %v884 = vadd.s32 %v883, %v881
  %v885 = vand.u32 %v856, 65535
  %v886 = vshra.s32 %v856, 16
  %v887 = vcvt.s32.f32 %v885
  %v888 = vcvt.s32.f32 %v886
  %889 = vmin.xlane.f32.xlu0 %v888
  %v890 = vpop.xlane.xlu0 %889
  %vm891 = vcmp.eq.f32.partialorder %v888, %v890
  %v892 = vsel %vm891, %v887, inf
  %893 = vmin.xlane.f32.xlu0 %v892
  %v894 = vpop.xlane.xlu0 %893
  %v895 = vcvt.f32.s32 %v894
  %v896 = vcvt.f32.s32 %v890
  %v897 = vshll.u32 %v896, 16
  %v898 = vadd.s32 %v897, %v895
  %v899 = vand.u32 %v857, 65535
  %v900 = vshra.s32 %v857, 16
  %v901 = vcvt.s32.f32 %v899
  %v902 = vcvt.s32.f32 %v900
  %903 = vmin.xlane.f32.xlu0 %v902
  %v904 = vpop.xlane.xlu0 %903
  %vm905 = vcmp.eq.f32.partialorder %v902, %v904
  %v906 = vsel %vm905, %v901, inf
  %907 = vmin.xlane.f32.xlu0 %v906
  %v908 = vpop.xlane.xlu0 %907
  %v909 = vcvt.f32.s32 %v908
  %v910 = vcvt.f32.s32 %v904
  %v911 = vshll.u32 %v910, 16
  %v912 = vadd.s32 %v911, %v909
  %v913 = vand.u32 %v858, 65535
  %v914 = vshra.s32 %v858, 16
  %v915 = vcvt.s32.f32 %v913
  %v916 = vcvt.s32.f32 %v914
  %917 = vmin.xlane.f32.xlu0 %v916
  %v918 = vpop.xlane.xlu0 %917
  %vm919 = vcmp.eq.f32.partialorder %v916, %v918
  %v920 = vsel %vm919, %v915, inf
  %921 = vmin.xlane.f32.xlu0 %v920
  %v922 = vpop.xlane.xlu0 %921
  %v923 = vcvt.f32.s32 %v922
  %v924 = vcvt.f32.s32 %v918
  %v925 = vshll.u32 %v924, 16
  %v926 = vadd.s32 %v925, %v923
  %v927 = vand.u32 %v859, 65535
  %v928 = vshra.s32 %v859, 16
  %v929 = vcvt.s32.f32 %v927
  %v930 = vcvt.s32.f32 %v928
  %931 = vmin.xlane.f32.xlu0 %v930
  %v932 = vpop.xlane.xlu0 %931
  %vm933 = vcmp.eq.f32.partialorder %v930, %v932
  %v934 = vsel %vm933, %v929, inf
  %935 = vmin.xlane.f32.xlu0 %v934
  %v936 = vpop.xlane.xlu0 %935
  %v937 = vcvt.f32.s32 %v936
  %v938 = vcvt.f32.s32 %v932
  %v939 = vshll.u32 %v938, 16
  %v940 = vadd.s32 %v939, %v937
  %v941 = vand.u32 %v860, 65535
  %v942 = vshra.s32 %v860, 16
  %v943 = vcvt.s32.f32 %v941
  %v944 = vcvt.s32.f32 %v942
  %945 = vmin.xlane.f32.xlu0 %v944
  %v946 = vpop.xlane.xlu0 %945
  %vm947 = vcmp.eq.f32.partialorder %v944, %v946
  %v948 = vsel %vm947, %v943, inf
  %949 = vmin.xlane.f32.xlu0 %v948
  %v950 = vpop.xlane.xlu0 %949
  %v951 = vcvt.f32.s32 %v950
  %v952 = vcvt.f32.s32 %v946
  %v953 = vshll.u32 %v952, 16
  %v954 = vadd.s32 %v953, %v951
  %v955 = vand.u32 %v861, 65535
  %v956 = vshra.s32 %v861, 16
  %v957 = vcvt.s32.f32 %v955
  %v958 = vcvt.s32.f32 %v956
  %959 = vmin.xlane.f32.xlu0 %v958
  %v960 = vpop.xlane.xlu0 %959
  %vm961 = vcmp.eq.f32.partialorder %v958, %v960
  %v962 = vsel %vm961, %v957, inf
  %963 = vmin.xlane.f32.xlu0 %v962
  %v964 = vpop.xlane.xlu0 %963
  %v965 = vcvt.f32.s32 %v964
  %v966 = vcvt.f32.s32 %v960
  %v967 = vshll.u32 %v966, 16
  %v968 = vadd.s32 %v967, %v965
  %v969 = vand.u32 %v862, 65535
  %v970 = vshra.s32 %v862, 16
  %v971 = vcvt.s32.f32 %v969
  %v972 = vcvt.s32.f32 %v970
  %973 = vmin.xlane.f32.xlu0 %v972
  %v974 = vpop.xlane.xlu0 %973
  %vm975 = vcmp.eq.f32.partialorder %v972, %v974
  %v976 = vsel %vm975, %v971, inf
  %977 = vmin.xlane.f32.xlu0 %v976
  %v978 = vpop.xlane.xlu0 %977
  %v979 = vcvt.f32.s32 %v978
  %v980 = vcvt.f32.s32 %v974
  %v981 = vshll.u32 %v980, 16
  %v982 = vadd.s32 %v981, %v979
  %v983 = vand.u32 %v863, 65535
  %v984 = vshra.s32 %v863, 16
  %v985 = vcvt.s32.f32 %v983
  %v986 = vcvt.s32.f32 %v984
  %987 = vmin.xlane.f32.xlu0 %v986
  %v988 = vpop.xlane.xlu0 %987
  %vm989 = vcmp.eq.f32.partialorder %v986, %v988
  %v990 = vsel %vm989, %v985, inf
  %991 = vmin.xlane.f32.xlu0 %v990
  %v992 = vpop.xlane.xlu0 %991
  %v993 = vcvt.f32.s32 %v992
  %v994 = vcvt.f32.s32 %v988
  %v995 = vshll.u32 %v994, 16
  %v996 = vadd.s32 %v995, %v993
  %v997 = vand.u32 %v864, 65535
  %v998 = vshra.s32 %v864, 16
  %v999 = vcvt.s32.f32 %v997
  %v1000 = vcvt.s32.f32 %v998
  %1001 = vmin.xlane.f32.xlu0 %v1000
  %v1002 = vpop.xlane.xlu0 %1001
  %vm1003 = vcmp.eq.f32.partialorder %v1000, %v1002
  %v1004 = vsel %vm1003, %v999, inf
  %1005 = vmin.xlane.f32.xlu0 %v1004
  %v1006 = vpop.xlane.xlu0 %1005
  %v1007 = vcvt.f32.s32 %v1006
  %v1008 = vcvt.f32.s32 %v1002
  %v1009 = vshll.u32 %v1008, 16
  %v1010 = vadd.s32 %v1009, %v1007
  %v1011 = vand.u32 %v865, 65535
  %v1012 = vshra.s32 %v865, 16
  %v1013 = vcvt.s32.f32 %v1011
  %v1014 = vcvt.s32.f32 %v1012
  %1015 = vmin.xlane.f32.xlu0 %v1014
  %v1016 = vpop.xlane.xlu0 %1015
  %vm1017 = vcmp.eq.f32.partialorder %v1014, %v1016
  %v1018 = vsel %vm1017, %v1013, inf
  %1019 = vmin.xlane.f32.xlu0 %v1018
  %v1020 = vpop.xlane.xlu0 %1019
  %v1021 = vcvt.f32.s32 %v1020
  %v1022 = vcvt.f32.s32 %v1016
  %v1023 = vshll.u32 %v1022, 16
  %v1024 = vadd.s32 %v1023, %v1021
  %v1025 = vand.u32 %v866, 65535
  %v1026 = vshra.s32 %v866, 16
  %v1027 = vcvt.s32.f32 %v1025
  %v1028 = vcvt.s32.f32 %v1026
  %1029 = vmin.xlane.f32.xlu0 %v1028
  %v1030 = vpop.xlane.xlu0 %1029
  %vm1031 = vcmp.eq.f32.partialorder %v1028, %v1030
  %v1032 = vsel %vm1031, %v1027, inf
  %1033 = vmin.xlane.f32.xlu0 %v1032
  %v1034 = vpop.xlane.xlu0 %1033
  %v1035 = vcvt.f32.s32 %v1034
  %v1036 = vcvt.f32.s32 %v1030
  %v1037 = vshll.u32 %v1036, 16
  %v1038 = vadd.s32 %v1037, %v1035
  %v1039 = vand.u32 %v867, 65535
  %v1040 = vshra.s32 %v867, 16
  %v1041 = vcvt.s32.f32 %v1039
  %v1042 = vcvt.s32.f32 %v1040
  %1043 = vmin.xlane.f32.xlu0 %v1042
  %v1044 = vpop.xlane.xlu0 %1043
  %vm1045 = vcmp.eq.f32.partialorder %v1042, %v1044
  %v1046 = vsel %vm1045, %v1041, inf
  %1047 = vmin.xlane.f32.xlu0 %v1046
  %v1048 = vpop.xlane.xlu0 %1047
  %v1049 = vcvt.f32.s32 %v1048
  %v1050 = vcvt.f32.s32 %v1044
  %v1051 = vshll.u32 %v1050, 16
  %v1052 = vadd.s32 %v1051, %v1049
  %v1053 = vand.u32 %v868, 65535
  %v1054 = vshra.s32 %v868, 16
  %v1055 = vcvt.s32.f32 %v1053
  %v1056 = vcvt.s32.f32 %v1054
  %1057 = vmin.xlane.f32.xlu0 %v1056
  %v1058 = vpop.xlane.xlu0 %1057
  %vm1059 = vcmp.eq.f32.partialorder %v1056, %v1058
  %v1060 = vsel %vm1059, %v1055, inf
  %1061 = vmin.xlane.f32.xlu0 %v1060
  %v1062 = vpop.xlane.xlu0 %1061
  %v1063 = vcvt.f32.s32 %v1062
  %v1064 = vcvt.f32.s32 %v1058
  %v1065 = vshll.u32 %v1064, 16
  %v1066 = vadd.s32 %v1065, %v1063
  %v1067 = vand.u32 %v869, 65535
  %v1068 = vshra.s32 %v869, 16
  %v1069 = vcvt.s32.f32 %v1067
  %v1070 = vcvt.s32.f32 %v1068
  %1071 = vmin.xlane.f32.xlu0 %v1070
  %v1072 = vpop.xlane.xlu0 %1071
  %vm1073 = vcmp.eq.f32.partialorder %v1070, %v1072
  %v1074 = vsel %vm1073, %v1069, inf
  %1075 = vmin.xlane.f32.xlu0 %v1074
  %v1076 = vpop.xlane.xlu0 %1075
  %v1077 = vcvt.f32.s32 %v1076
  %v1078 = vcvt.f32.s32 %v1072
  %v1079 = vshll.u32 %v1078, 16
  %v1080 = vadd.s32 %v1079, %v1077
  %v1081 = vand.u32 %v870, 65535
  %v1082 = vshra.s32 %v870, 16
  %v1083 = vcvt.s32.f32 %v1081
  %v1084 = vcvt.s32.f32 %v1082
  %1085 = vmin.xlane.f32.xlu0 %v1084
  %v1086 = vpop.xlane.xlu0 %1085
  %vm1087 = vcmp.eq.f32.partialorder %v1084, %v1086
  %v1088 = vsel %vm1087, %v1083, inf
  %1089 = vmin.xlane.f32.xlu0 %v1088
  %v1090 = vpop.xlane.xlu0 %1089
  %v1091 = vcvt.f32.s32 %v1090
  %v1092 = vcvt.f32.s32 %v1086
  %v1093 = vshll.u32 %v1092, 16
  %v1094 = vadd.s32 %v1093, %v1091
  %v1095 = vlaneseq
  %v1096 = vshrl.u32 %v1095, 7
  %v1097 = vsub.s32 %v838, %v1096
  %v1098 = vrot.slane %v884, %v1097
  %v1099 = vadd.s32 %v838, 4294967288
  %v1100 = vlaneseq
  %v1101 = vshrl.u32 %v1100, 7
  %v1102 = vsub.s32 %v1099, %v1101
  %v1103 = vrot.slane %v898, %v1102
  %vm1104 = vcmask 130112
  %v1105 = vsel %vm1104, %v1103, %v1098
  %v1106 = vadd.s32 %v838, 4294967280
  %v1107 = vlaneseq
  %v1108 = vshrl.u32 %v1107, 7
  %v1109 = vsub.s32 %v1106, %v1108
  %v1110 = vrot.slane %v912, %v1109
  %vm1111 = vcmask 195712
  %v1112 = vsel %vm1111, %v1110, %v1105
  %v1113 = vadd.s32 %v838, 4294967272
  %v1114 = vlaneseq
  %v1115 = vshrl.u32 %v1114, 7
  %v1116 = vsub.s32 %v1113, %v1115
  %v1117 = vrot.slane %v926, %v1116
  %vm1118 = vcmask 261312
  %v1119 = vsel %vm1118, %v1117, %v1112
  %v1120 = vadd.s32 %v838, 4294967264
  %v1121 = vlaneseq
  %v1122 = vshrl.u32 %v1121, 7
  %v1123 = vsub.s32 %v1120, %v1122
  %v1124 = vrot.slane %v940, %v1123
  %vm1125 = vcmask 326912
  %v1126 = vsel %vm1125, %v1124, %v1119
  %v1127 = vadd.s32 %v838, 4294967256
  %v1128 = vlaneseq
  %v1129 = vshrl.u32 %v1128, 7
  %v1130 = vsub.s32 %v1127, %v1129
  %v1131 = vrot.slane %v954, %v1130
  %vm1132 = vcmask 392512
  %v1133 = vsel %vm1132, %v1131, %v1126
  %v1134 = vadd.s32 %v838, 4294967248
  %v1135 = vlaneseq
  %v1136 = vshrl.u32 %v1135, 7
  %v1137 = vsub.s32 %v1134, %v1136
  %v1138 = vrot.slane %v968, %v1137
  %vm1139 = vcmask 458112
  %v1140 = vsel %vm1139, %v1138, %v1133
  %v1141 = vadd.s32 %v838, 4294967240
  %v1142 = vlaneseq
  %v1143 = vshrl.u32 %v1142, 7
  %v1144 = vsub.s32 %v1141, %v1143
  %v1145 = vrot.slane %v982, %v1144
  %vm1146 = vcmask 523712
  %v1147 = vsel %vm1146, %v1145, %v1140
  %v1148 = vadd.s32 %v838, 4294967232
  %v1149 = vlaneseq
  %v1150 = vshrl.u32 %v1149, 7
  %v1151 = vsub.s32 %v1148, %v1150
  %v1152 = vrot.slane %v996, %v1151
  %vm1153 = vcmask 589312
  %v1154 = vsel %vm1153, %v1152, %v1147
  %v1155 = vadd.s32 %v838, 4294967224
  %v1156 = vlaneseq
  %v1157 = vshrl.u32 %v1156, 7
  %v1158 = vsub.s32 %v1155, %v1157
  %v1159 = vrot.slane %v1010, %v1158
  %vm1160 = vcmask 654912
  %v1161 = vsel %vm1160, %v1159, %v1154
  %v1162 = vadd.s32 %v838, 4294967216
  %v1163 = vlaneseq
  %v1164 = vshrl.u32 %v1163, 7
  %v1165 = vsub.s32 %v1162, %v1164
  %v1166 = vrot.slane %v1024, %v1165
  %vm1167 = vcmask 720512
  %v1168 = vsel %vm1167, %v1166, %v1161
  %v1169 = vadd.s32 %v838, 4294967208
  %v1170 = vlaneseq
  %v1171 = vshrl.u32 %v1170, 7
  %v1172 = vsub.s32 %v1169, %v1171
  %v1173 = vrot.slane %v1038, %v1172
  %vm1174 = vcmask 786112
  %v1175 = vsel %vm1174, %v1173, %v1168
  %v1176 = vadd.s32 %v838, 4294967200
  %v1177 = vlaneseq
  %v1178 = vshrl.u32 %v1177, 7
  %v1179 = vsub.s32 %v1176, %v1178
  %v1180 = vrot.slane %v1052, %v1179
  %vm1181 = vcmask 851712
  %v1182 = vsel %vm1181, %v1180, %v1175
  %v1183 = vadd.s32 %v838, 4294967192
  %v1184 = vlaneseq
  %v1185 = vshrl.u32 %v1184, 7
  %v1186 = vsub.s32 %v1183, %v1185
  %v1187 = vrot.slane %v1066, %v1186
  %vm1188 = vcmask 917312
  %v1189 = vsel %vm1188, %v1187, %v1182
  %v1190 = vadd.s32 %v838, 4294967184
  %v1191 = vlaneseq
  %v1192 = vshrl.u32 %v1191, 7
  %v1193 = vsub.s32 %v1190, %v1192
  %v1194 = vrot.slane %v1080, %v1193
  %vm1195 = vcmask 982912
  %v1196 = vsel %vm1195, %v1194, %v1189
  %v1197 = vadd.s32 %v838, 4294967176
  %v1198 = vlaneseq
  %v1199 = vshrl.u32 %v1198, 7
  %v1200 = vsub.s32 %v1197, %v1199
  %v1201 = vrot.slane %v1094, %v1200
  %vm1202 = vcmask 1048512
  %v1203 = vsel %vm1202, %v1201, %v1196
  %1204 = vst [vmem:[%s8] sm:$0x1] %v1203
  // Predicated region
  $region34: #{_nonblank_span.3} parent=0 // pred_check
    _
  $region35: #{_nonblank_span.3} parent=0 // pred_check_branch
    %1206 = sbr.rel (0) target = $region37
  $region36: #{_nonblank_span.3} parent=0 // pred_region
    _
  $region37: #{_nonblank_span.3} parent=0 // pred_fallthru
    _
  // Predicated region
  $region38: #{_nonblank_span.3} parent=0 // pred_check
    _
  $region39: #{_nonblank_span.3} parent=0 // pred_check_branch
    %1208 = sbr.rel (0) target = $region41
  $region40: #{_nonblank_span.3} parent=0 // pred_region
    _
  $region41: #{_nonblank_span.3} parent=0 // pred_fallthru
    _

</llo_original>
